<compile_context>
chip_gen: v7x
topology: tpu7x:2x2x1
jax: 0.10.0
libtpu: 0.0.40
codegen_flags: <defaults>
</compile_context>

<pallas_src>
import functools

import jax
import jax.numpy as jnp
from jax import lax
from jax.experimental import pallas as pl
from jax.experimental.pallas import tpu as pltpu


def _lora_kernel_resident_wb(cache_ref, wa_ref, wb_ref, o_ref, *, tn):
    """W_B held fully resident in VMEM; slice the needed column panel."""
    j = pl.program_id(1)
    col = j * tn
    if tn % 128 == 0:
        col = pl.multiple_of(col, 128)
    wb_tile = wb_ref[:, pl.ds(col, tn)]            # (R, tn)
    res = lax.dot_general(
        wa_ref[...], wb_tile,                      # (tm, R) @ (R, tn)
        dimension_numbers=(((1,), (0,)), ((), ())),
        preferred_element_type=jnp.float32,
    )
    o_ref[...] = (cache_ref[...].astype(jnp.float32) + res).astype(o_ref.dtype)


def _lora_kernel_panel_wb(cache_ref, wa_ref, wb_ref, o_ref):
    """Fallback: W_B streamed as (R, tn) column panels."""
    res = lax.dot_general(
        wa_ref[...], wb_ref[...],
        dimension_numbers=(((1,), (0,)), ((), ())),
        preferred_element_type=jnp.float32,
    )
    o_ref[...] = (cache_ref[...].astype(jnp.float32) + res).astype(o_ref.dtype)


def _pick_tile(dim, cap, quantum):
    """Largest multiple of `quantum` that divides `dim` and is <= `cap`.
    Falls back to the full extent (always a legal block shape)."""
    if dim <= cap:
        return dim
    t = (cap // quantum) * quantum
    while t >= quantum:
        if dim % t == 0:
            return t
        t -= quantum
    return dim


def lora_forward(cache_keys, w_a, w_b, *, tm=None, tn=None,
                 wb_resident_bytes_cap=4 << 20):
    """new_cache_keys = cache_keys + w_a @ w_b  (Pallas TPU)."""
    M, N = cache_keys.shape
    R = w_a.shape[1]
    assert w_a.shape == (M, R) and w_b.shape == (R, N)

    # Big, generation-safe tiles: 256x1024 f32 double-buffered (cache in +
    # out + W_A panels + resident W_B) is ~8-9 MiB -> fits v5e's 16 MiB
    # default scoped VMEM and leaves lots of headroom on v6e/v7x.
    if tm is None:
        tm = _pick_tile(M, 256, 8)
    if tn is None:
        tn = _pick_tile(N, 1024, 128)
    assert M % tm == 0 and N % tn == 0, "tile picker must produce exact tiling"

    grid = (M // tm, N // tn)

    cache_isz = jnp.dtype(cache_keys.dtype).itemsize
    wa_isz = jnp.dtype(w_a.dtype).itemsize
    wb_isz = jnp.dtype(w_b.dtype).itemsize

    # Keep the whole of W_B resident when it is small (typical LoRA): it is
    # DMAed exactly once instead of M/tm times.
    wb_resident = (R * N * wb_isz) <= wb_resident_bytes_cap
    if wb_resident:
        kernel = functools.partial(_lora_kernel_resident_wb, tn=tn)
        wb_spec = pl.BlockSpec((R, N), lambda i, j: (0, 0))
    else:
        kernel = _lora_kernel_panel_wb
        wb_spec = pl.BlockSpec((R, tn), lambda i, j: (0, j))

    cost = pl.CostEstimate(
        flops=2 * M * N * R,
        bytes_accessed=cache_isz * 2 * M * N + wa_isz * M * R + wb_isz * R * N,
        transcendentals=0,
    )

    # TODO(synk): if the caller semantically replaces cache_keys, donate it and
    # add input_output_aliases={0: 0}; the PyTorch module returns a new tensor
    # (clone + add), so we keep distinct output buffers here.
    return pl.pallas_call(
        kernel,
        out_shape=jax.ShapeDtypeStruct((M, N), cache_keys.dtype),
        grid=grid,
        in_specs=[
            pl.BlockSpec((tm, tn), lambda i, j: (i, j)),   # cache_keys tile
            pl.BlockSpec((tm, R), lambda i, j: (i, 0)),    # W_A row panel
            wb_spec,                                       # W_B (resident/panel)
        ],
        out_specs=pl.BlockSpec((tm, tn), lambda i, j: (i, j)),
        compiler_params=pltpu.CompilerParams(
            dimension_semantics=("parallel", "parallel")),
        cost_estimate=cost,
    )(cache_keys, w_a, w_b)


if __name__ == "__main__":
    # Small, TPU-friendly shapes consistent with the module
    # (in_dim x out_dim cache, low-rank factors).
    in_dim, out_dim, rank = 256, 512, 128

    key = jax.random.PRNGKey(0)
    kc, ka, kb = jax.random.split(key, 3)

    cache_keys = jax.random.normal(kc, (in_dim, out_dim), dtype=jnp.float32)
    # W_A ~ kaiming-ish random; W_B random (the module inits it to zeros, but
    # we exercise the general forward math).
    w_a = jax.random.normal(ka, (in_dim, rank), dtype=jnp.float32) * 0.05
    w_b = jax.random.normal(kb, (rank, out_dim), dtype=jnp.float32) * 0.05

    ref = cache_keys + w_a @ w_b

    # Main path: resident W_B.
    out = jax.block_until_ready(lora_forward(cache_keys, w_a, w_b))
    assert out.shape == (in_dim, out_dim)
    assert jnp.allclose(out, ref, atol=1e-4, rtol=1e-4)

    # Also exercise the streamed-panel fallback (used when R*N is large).
    out2 = jax.block_until_ready(
        lora_forward(cache_keys, w_a, w_b, wb_resident_bytes_cap=0))
    assert jnp.allclose(out2, ref, atol=1e-4, rtol=1e-4)

    print("KERNEL_OK")
</pallas_src>

<mosaic_0001>
module attributes {stable_mosaic.version = 11 : i64} {
  func.func @_lora_kernel_resident_wb(%arg0: i32, %arg1: i32, %arg2: memref<256x512xf32, #tpu.memory_space<vmem>>, %arg3: memref<256x128xf32, #tpu.memory_space<vmem>>, %arg4: memref<128x512xf32, #tpu.memory_space<vmem>>, %arg5: memref<256x512xf32, #tpu.memory_space<vmem>>) attributes {dimension_semantics = [#tpu.dimension_semantics<parallel>, #tpu.dimension_semantics<parallel>], iteration_bounds = array<i64: 1, 1>, scalar_prefetch = 0 : i64, scratch_operands = 0 : i64, tpu.core_type = #tpu.core_type<tc>, window_params = [{transform_indices = @transform_0, window_bounds = array<i64: 256, 512>}, {transform_indices = @transform_1, window_bounds = array<i64: 256, 128>}, {pipeline_mode = #tpu.pipeline_mode<synchronous>, transform_indices = @transform_2, window_bounds = array<i64: 128, 512>}, {transform_indices = @transform_3, window_bounds = array<i64: 256, 512>}]} {
    %c512_i32 = arith.constant 512 : i32
    %0 = arith.muli %arg1, %c512_i32 : i32
    %1 = tpu.assume_multiple %0, 128 : i32
    %c0 = arith.constant 0 : index
    %2 = arith.index_cast %1 : i32 to index
    %3 = vector.load %arg4[%c0, %2] : memref<128x512xf32, #tpu.memory_space<vmem>>, vector<128x512xf32>
    %c0_0 = arith.constant 0 : index
    %c0_1 = arith.constant 0 : index
    %4 = vector.load %arg3[%c0_0, %c0_1] : memref<256x128xf32, #tpu.memory_space<vmem>>, vector<256x128xf32>
    %cst = arith.constant dense<0.000000e+00> : vector<256x512xf32>
    %5 = tpu.matmul %4, %3, %cst {dimension_numbers = #tpu.dot_dimension_numbers<[1], [0], [0], [1], [0, 0, 1, 1], [], []>} : vector<256x128xf32>, vector<128x512xf32>, vector<256x512xf32> -> vector<256x512xf32>
    %c0_2 = arith.constant 0 : index
    %c0_3 = arith.constant 0 : index
    %6 = vector.load %arg2[%c0_2, %c0_3] : memref<256x512xf32, #tpu.memory_space<vmem>>, vector<256x512xf32>
    %7 = arith.addf %6, %5 : vector<256x512xf32>
    %c0_4 = arith.constant 0 : index
    %c0_5 = arith.constant 0 : index
    %8 = vector.load %arg5[%c0_4, %c0_5] : memref<256x512xf32, #tpu.memory_space<vmem>>, vector<256x512xf32>
    tpu.vector_store %arg5[%c0_4, %c0_5], %7 {strides = array<i32>} : memref<256x512xf32, #tpu.memory_space<vmem>>, vector<256x512xf32>,
    return
  }
  func.func @transform_0(%arg0: i32, %arg1: i32) -> (i32, i32) {
    %c0_i32 = arith.constant 0 : i32
    return %arg0, %arg1 : i32, i32
  }
  func.func @transform_1(%arg0: i32, %arg1: i32) -> (i32, i32) {
    %c0_i32 = arith.constant 0 : i32
    %c0_i32_0 = arith.constant 0 : i32
    return %arg0, %c0_i32 : i32, i32
  }
  func.func @transform_2(%arg0: i32, %arg1: i32) -> (i32, i32) {
    %c0_i32 = arith.constant 0 : i32
    %c0_i32_0 = arith.constant 0 : i32
    %c0_i32_1 = arith.constant 0 : i32
    return %c0_i32, %c0_i32_0 : i32, i32
  }
  func.func @transform_3(%arg0: i32, %arg1: i32) -> (i32, i32) {
    %c0_i32 = arith.constant 0 : i32
    return %arg0, %arg1 : i32, i32
  }
}

</mosaic_0001>

<llo_original>
// kernel: tpu_custom_call.1
$region0: #{tpu_custom_call.1}
  #allocation0 [shape = 'u32[]', space=smem, size = 0x4, offset = 0x4, fixed_abs, tag = 'smem constant byte address 0x4 - core index']
  #allocation1 [shape = 'u32[144,128]{1,0:T(1,128)}', space=vmem, size = 0x12000, scoped, tag = 'internal scratch']
  %s0 = inlined_call_operand.hbm [shape: f32[256,512], index: 0, kind: input, shape index: {}]
  %s1 = inlined_call_operand.hbm [shape: f32[256,128], index: 1, kind: input, shape index: {}]
  %s2 = inlined_call_operand.hbm [shape: f32[128,512], index: 2, kind: input, shape index: {}]
  %s3 = inlined_call_operand.hbm [shape: f32[256,512], index: 3, kind: output, shape index: {}]
  %s4 = sld [smem:[#allocation0]]
  $region34: #{tpu_custom_call.1} parent=0
    _
  %s6 = ssub.s32 1, %s4
  %s7 = scalar_select 0, %s6, %s4
  $region1: #{tpu_custom_call.1} parent=0
    #allocation2 [shape = 'u8[524288]{0}', space=vmem, size = 0x80000, scoped, tag = 'input window, operand 0, single buffered']
    #allocation3 [shape = 's32[1]{0}', space=sflag, size = 0x4, scoped, tag = 'scoped memory for tpu_custom_call.1']
    #allocation4 [shape = 's32[1]{0}', space=sflag, size = 0x4, scoped, tag = 'scoped memory for tpu_custom_call.1']
    #allocation5 [shape = 'u8[131072]{0}', space=vmem, size = 0x20000, scoped, tag = 'input window, operand 1, single buffered']
    #allocation6 [shape = 's32[1]{0}', space=sflag, size = 0x4, scoped, tag = 'scoped memory for tpu_custom_call.1']
    #allocation7 [shape = 'u8[262144]{0}', space=vmem, size = 0x40000, scoped, tag = 'input window, operand 2, single buffered']
    #allocation8 [shape = 'u8[524288]{0}', space=vmem, size = 0x80000, scoped, tag = 'output window, operand 0, single buffered']
    %8 = vsyncpa [#allocation3], 0
    %9 = vsyncpa [#allocation6], 0
    %10 = vsyncpa [#allocation4], 0
    // Predicated region
    $region2: #{tpu_custom_call.1} parent=1 // pred_check
      _
    $region3: #{tpu_custom_call.1} parent=1 // pred_check_branch
      %12 = sbr.rel (0) target = $region5
    $region4: #{tpu_custom_call.1} parent=1 // pred_region
      %s14 = ssub.s32 16384, 16384
      %15 = vsyncadd [#allocation3], %s14
      %s16 = sshll.u32 [#allocation2], 4
      %s17 = int_to_ptr.vmem [resolvable:$true] %s16
      %22 = dma.hbm_to_vmem [thread:$0]  %s0, 16384, %s17, [#allocation3], 512, 512, 32
    $region5: #{tpu_custom_call.1} parent=1 // pred_fallthru
      _
    // Predicated region
    $region6: #{tpu_custom_call.1} parent=1 // pred_check
      _
    $region7: #{tpu_custom_call.1} parent=1 // pred_check_branch
      %24 = sbr.rel (0) target = $region9
    $region8: #{tpu_custom_call.1} parent=1 // pred_region
      %s26 = ssub.s32 4096, 4096
      %27 = vsyncadd [#allocation6], %s26
      %s28 = sshll.u32 [#allocation5], 4
      %s29 = int_to_ptr.vmem [resolvable:$true] %s28
      %34 = dma.hbm_to_vmem [thread:$0]  %s1, 4096, %s29, [#allocation6], 128, 128, 8
    $region9: #{tpu_custom_call.1} parent=1 // pred_fallthru
      _
    // Predicated region
    $region10: #{tpu_custom_call.1} parent=1 // pred_check
      _
    $region11: #{tpu_custom_call.1} parent=1 // pred_check_branch
      %36 = sbr.rel (0) target = $region13
    $region12: #{tpu_custom_call.1} parent=1 // pred_region
      %s38 = ssub.s32 8192, 8192
      %39 = vsyncadd [#allocation6], %s38
      %s40 = sshll.u32 [#allocation7], 4
      %s41 = int_to_ptr.vmem [resolvable:$true] %s40
      %46 = dma.hbm_to_vmem [thread:$0]  %s2, 8192, %s41, [#allocation6], 512, 512, 32
    $region13: #{tpu_custom_call.1} parent=1 // pred_fallthru
      _
    // Predicated region
    $region14: #{tpu_custom_call.1} parent=1 // pred_check
      _
    $region15: #{tpu_custom_call.1} parent=1 // pred_check_branch
      %48 = sbr.rel (0) target = $region17
    $region16: #{tpu_custom_call.1} parent=1 // pred_region
      %49 = dma.done [#allocation3], 16384
    $region17: #{tpu_custom_call.1} parent=1 // pred_fallthru
      _
    // Predicated region
    $region18: #{tpu_custom_call.1} parent=1 // pred_check
      _
    $region19: #{tpu_custom_call.1} parent=1 // pred_check_branch
      %51 = sbr.rel (0) target = $region21
    $region20: #{tpu_custom_call.1} parent=1 // pred_region
      %52 = dma.done [#allocation6], 4096
    $region21: #{tpu_custom_call.1} parent=1 // pred_fallthru
      _
    // Predicated region
    $region22: #{tpu_custom_call.1} parent=1 // pred_check
      _
    $region23: #{tpu_custom_call.1} parent=1 // pred_check_branch
      %54 = sbr.rel (0) target = $region25
    $region24: #{tpu_custom_call.1} parent=1 // pred_region
      %55 = dma.done [#allocation6], 8192
    $region25: #{tpu_custom_call.1} parent=1 // pred_fallthru
      _
    %s56 = smul.u32 0, 512
    %s57 = sshra.s32 %s56, 7
    %s58 = sand.u32 %s56, 127
    %s59 = smul.addr %s57, 8
    %s60 = scalar_lea.vmem [#allocation7], %s59
    %v61 = vld [vmem:[%s60] sm:$0xff]
    %v62 = vld [vmem:[%s60 + $0x8] sm:$0xff]
    %v63 = vld [vmem:[%s60 + $0x10] sm:$0xff]
    %v64 = vld [vmem:[%s60 + $0x18] sm:$0xff]
    %v65 = vld [vmem:[%s60 + $0x20] sm:$0xff]
    %v66 = vld [vmem:[%s60 + $0x28] sm:$0xff]
    %v67 = vld [vmem:[%s60 + $0x30] sm:$0xff]
    %v68 = vld [vmem:[%s60 + $0x38] sm:$0xff]
    %v69 = vld [vmem:[%s60 + $0x40] sm:$0xff]
    %v70 = vld [vmem:[%s60 + $0x48] sm:$0xff]
    %v71 = vld [vmem:[%s60 + $0x50] sm:$0xff]
    %v72 = vld [vmem:[%s60 + $0x58] sm:$0xff]
    %v73 = vld [vmem:[%s60 + $0x60] sm:$0xff]
    %v74 = vld [vmem:[%s60 + $0x68] sm:$0xff]
    %v75 = vld [vmem:[%s60 + $0x70] sm:$0xff]
    %v76 = vld [vmem:[%s60 + $0x78] sm:$0xff]
    %v77 = vld [vmem:[%s60 + $0x80] sm:$0xff]
    %v78 = vld [vmem:[%s60 + $0x88] sm:$0xff]
    %v79 = vld [vmem:[%s60 + $0x90] sm:$0xff]
    %v80 = vld [vmem:[%s60 + $0x98] sm:$0xff]
    %v81 = vld [vmem:[%s60 + $0xa0] sm:$0xff]
    %v82 = vld [vmem:[%s60 + $0xa8] sm:$0xff]
    %v83 = vld [vmem:[%s60 + $0xb0] sm:$0xff]
    %v84 = vld [vmem:[%s60 + $0xb8] sm:$0xff]
    %v85 = vld [vmem:[%s60 + $0xc0] sm:$0xff]
    %v86 = vld [vmem:[%s60 + $0xc8] sm:$0xff]
    %v87 = vld [vmem:[%s60 + $0xd0] sm:$0xff]
    %v88 = vld [vmem:[%s60 + $0xd8] sm:$0xff]
    %v89 = vld [vmem:[%s60 + $0xe0] sm:$0xff]
    %v90 = vld [vmem:[%s60 + $0xe8] sm:$0xff]
    %v91 = vld [vmem:[%s60 + $0xf0] sm:$0xff]
    %v92 = vld [vmem:[%s60 + $0xf8] sm:$0xff]
    %v93 = vld [vmem:[%s60 + $0x100] sm:$0xff]
    %v94 = vld [vmem:[%s60 + $0x108] sm:$0xff]
    %v95 = vld [vmem:[%s60 + $0x110] sm:$0xff]
    %v96 = vld [vmem:[%s60 + $0x118] sm:$0xff]
    %v97 = vld [vmem:[%s60 + $0x120] sm:$0xff]
    %v98 = vld [vmem:[%s60 + $0x128] sm:$0xff]
    %v99 = vld [vmem:[%s60 + $0x130] sm:$0xff]
    %v100 = vld [vmem:[%s60 + $0x138] sm:$0xff]
    %v101 = vld [vmem:[%s60 + $0x140] sm:$0xff]
    %v102 = vld [vmem:[%s60 + $0x148] sm:$0xff]
    %v103 = vld [vmem:[%s60 + $0x150] sm:$0xff]
    %v104 = vld [vmem:[%s60 + $0x158] sm:$0xff]
    %v105 = vld [vmem:[%s60 + $0x160] sm:$0xff]
    %v106 = vld [vmem:[%s60 + $0x168] sm:$0xff]
    %v107 = vld [vmem:[%s60 + $0x170] sm:$0xff]
    %v108 = vld [vmem:[%s60 + $0x178] sm:$0xff]
    %v109 = vld [vmem:[%s60 + $0x180] sm:$0xff]
    %v110 = vld [vmem:[%s60 + $0x188] sm:$0xff]
    %v111 = vld [vmem:[%s60 + $0x190] sm:$0xff]
    %v112 = vld [vmem:[%s60 + $0x198] sm:$0xff]
    %v113 = vld [vmem:[%s60 + $0x1a0] sm:$0xff]
    %v114 = vld [vmem:[%s60 + $0x1a8] sm:$0xff]
    %v115 = vld [vmem:[%s60 + $0x1b0] sm:$0xff]
    %v116 = vld [vmem:[%s60 + $0x1b8] sm:$0xff]
    %v117 = vld [vmem:[%s60 + $0x1c0] sm:$0xff]
    %v118 = vld [vmem:[%s60 + $0x1c8] sm:$0xff]
    %v119 = vld [vmem:[%s60 + $0x1d0] sm:$0xff]
    %v120 = vld [vmem:[%s60 + $0x1d8] sm:$0xff]
    %v121 = vld [vmem:[%s60 + $0x1e0] sm:$0xff]
    %v122 = vld [vmem:[%s60 + $0x1e8] sm:$0xff]
    %v123 = vld [vmem:[%s60 + $0x1f0] sm:$0xff]
    %v124 = vld [vmem:[%s60 + $0x1f8] sm:$0xff]
    %v125 = vld [vmem:[#allocation5] sm:$0xff]
    %v126 = vld [vmem:[#allocation5 + $0x8] sm:$0xff]
    %v127 = vld [vmem:[#allocation5 + $0x10] sm:$0xff]
    %v128 = vld [vmem:[#allocation5 + $0x18] sm:$0xff]
    %v129 = vld [vmem:[#allocation5 + $0x20] sm:$0xff]
    %v130 = vld [vmem:[#allocation5 + $0x28] sm:$0xff]
    %v131 = vld [vmem:[#allocation5 + $0x30] sm:$0xff]
    %v132 = vld [vmem:[#allocation5 + $0x38] sm:$0xff]
    %v133 = vld [vmem:[#allocation5 + $0x40] sm:$0xff]
    %v134 = vld [vmem:[#allocation5 + $0x48] sm:$0xff]
    %v135 = vld [vmem:[#allocation5 + $0x50] sm:$0xff]
    %v136 = vld [vmem:[#allocation5 + $0x58] sm:$0xff]
    %v137 = vld [vmem:[#allocation5 + $0x60] sm:$0xff]
    %v138 = vld [vmem:[#allocation5 + $0x68] sm:$0xff]
    %v139 = vld [vmem:[#allocation5 + $0x70] sm:$0xff]
    %v140 = vld [vmem:[#allocation5 + $0x78] sm:$0xff]
    %v141 = vld [vmem:[#allocation5 + $0x80] sm:$0xff]
    %v142 = vld [vmem:[#allocation5 + $0x88] sm:$0xff]
    %v143 = vld [vmem:[#allocation5 + $0x90] sm:$0xff]
    %v144 = vld [vmem:[#allocation5 + $0x98] sm:$0xff]
    %v145 = vld [vmem:[#allocation5 + $0xa0] sm:$0xff]
    %v146 = vld [vmem:[#allocation5 + $0xa8] sm:$0xff]
    %v147 = vld [vmem:[#allocation5 + $0xb0] sm:$0xff]
    %v148 = vld [vmem:[#allocation5 + $0xb8] sm:$0xff]
    %v149 = vld [vmem:[#allocation5 + $0xc0] sm:$0xff]
    %v150 = vld [vmem:[#allocation5 + $0xc8] sm:$0xff]
    %v151 = vld [vmem:[#allocation5 + $0xd0] sm:$0xff]
    %v152 = vld [vmem:[#allocation5 + $0xd8] sm:$0xff]
    %v153 = vld [vmem:[#allocation5 + $0xe0] sm:$0xff]
    %v154 = vld [vmem:[#allocation5 + $0xe8] sm:$0xff]
    %v155 = vld [vmem:[#allocation5 + $0xf0] sm:$0xff]
    %v156 = vld [vmem:[#allocation5 + $0xf8] sm:$0xff]
    %157 = vmatprep.subr.mxu0 %v62
    %158 = vmatpush1.msra.mxu0 %v61
    %159 = vmatprep.subr.mxu0 %v66
    %160 = vmatpush1.msra.mxu0 %v65
    %161 = vmatprep.subr.mxu0 %v70
    %162 = vmatpush1.msra.mxu0 %v69
    %163 = vmatprep.subr.mxu0 %v74
    %164 = vmatpush1.msra.mxu0 %v73
    %165 = vmatprep.subr.mxu0 %v78
    %166 = vmatpush1.msra.mxu0 %v77
    %167 = vmatprep.subr.mxu0 %v82
    %168 = vmatpush1.msra.mxu0 %v81
    %169 = vmatprep.subr.mxu0 %v86
    %170 = vmatpush1.msra.mxu0 %v85
    %171 = vmatprep.subr.mxu0 %v90
    %172 = vmatpush1.msra.mxu0 %v89
    %173 = vmatprep.subr.mxu0 %v94
    %174 = vmatpush1.msra.mxu0 %v93
    %175 = vmatprep.subr.mxu0 %v98
    %176 = vmatpush1.msra.mxu0 %v97
    %177 = vmatprep.subr.mxu0 %v102
    %178 = vmatpush1.msra.mxu0 %v101
    %179 = vmatprep.subr.mxu0 %v106
    %180 = vmatpush1.msra.mxu0 %v105
    %181 = vmatprep.subr.mxu0 %v110
    %182 = vmatpush1.msra.mxu0 %v109
    %183 = vmatprep.subr.mxu0 %v114
    %184 = vmatpush1.msra.mxu0 %v113
    %185 = vmatprep.subr.mxu0 %v118
    %186 = vmatpush1.msra.mxu0 %v117
    %187 = vmatprep.subr.mxu0 %v122
    %188 = vmatpush1.msra.mxu0 %v121
    %189 = vmatprep.subr.mxu0 0.0
    %190 = vmatpush1.msra.mxu0 0.0
    %191 = vmatprep.subr.mxu0 0.0
    %192 = vmatpush1.msra.mxu0 0.0
    %193 = vmatprep.subr.mxu0 0.0
    %194 = vmatpush1.msra.mxu0 0.0
    %195 = vmatprep.subr.mxu0 0.0
    %196 = vmatpush1.msra.mxu0 0.0
    %197 = vmatprep.subr.mxu0 0.0
    %198 = vmatpush1.msra.mxu0 0.0
    %199 = vmatprep.subr.mxu0 0.0
    %200 = vmatpush1.msra.mxu0 0.0
    %201 = vmatprep.subr.mxu0 0.0
    %202 = vmatpush1.msra.mxu0 0.0
    %203 = vmatprep.subr.mxu0 0.0
    %204 = vmatpush1.msra.mxu0 0.0
    %205 = vmatprep.subr.mxu0 0.0
    %206 = vmatpush1.msra.mxu0 0.0
    %207 = vmatprep.subr.mxu0 0.0
    %208 = vmatpush1.msra.mxu0 0.0
    %209 = vmatprep.subr.mxu0 0.0
    %210 = vmatpush1.msra.mxu0 0.0
    %211 = vmatprep.subr.mxu0 0.0
    %212 = vmatpush1.msra.mxu0 0.0
    %213 = vmatprep.subr.mxu0 0.0
    %214 = vmatpush1.msra.mxu0 0.0
    %215 = vmatprep.subr.mxu0 0.0
    %216 = vmatpush1.msra.mxu0 0.0
    %217 = vmatprep.subr.mxu0 0.0
    %218 = vmatpush1.msra.mxu0 0.0
    %219 = vmatprep.subr.mxu0 0.0
    %220 = vmatpush1.msra.mxu0 0.0
    %221 = vmatprep.mubr.f32.mxu0 0.0
    %222 = vmatmul.mubr.f32.gmra.mrb[0].mxu0 %v125
    %v223 = vpop.f32.mrb[0].mxu0
    %v224 = vadd.f32 0.0, %v223
    %v225 = vpop.f32.mrb[0].mxu0
    %v226 = vadd.f32 0.0, %v225
    %227 = vmatprep.mubr.f32.mxu0 0.0
    %228 = vmatmul.mubr.f32.gmra.mrb[0].mxu0 %v126
    %v229 = vpop.f32.mrb[0].mxu0
    %v230 = vadd.f32 0.0, %v229
    %v231 = vpop.f32.mrb[0].mxu0
    %v232 = vadd.f32 0.0, %v231
    %233 = vmatprep.mubr.f32.mxu0 0.0
    %234 = vmatmul.mubr.f32.gmra.mrb[0].mxu0 %v127
    %v235 = vpop.f32.mrb[0].mxu0
    %v236 = vadd.f32 0.0, %v235
    %v237 = vpop.f32.mrb[0].mxu0
    %v238 = vadd.f32 0.0, %v237
    %239 = vmatprep.mubr.f32.mxu0 0.0
    %240 = vmatmul.mubr.f32.gmra.mrb[0].mxu0 %v128
    %v241 = vpop.f32.mrb[0].mxu0
    %v242 = vadd.f32 0.0, %v241
    %v243 = vpop.f32.mrb[0].mxu0
    %v244 = vadd.f32 0.0, %v243
    %245 = vmatprep.mubr.f32.mxu0 0.0
    %246 = vmatmul.mubr.f32.gmra.mrb[0].mxu0 %v129
    %v247 = vpop.f32.mrb[0].mxu0
    %v248 = vadd.f32 0.0, %v247
    %v249 = vpop.f32.mrb[0].mxu0
    %v250 = vadd.f32 0.0, %v249
    %251 = vmatprep.mubr.f32.mxu0 0.0
    %252 = vmatmul.mubr.f32.gmra.mrb[0].mxu0 %v130
    %v253 = vpop.f32.mrb[0].mxu0
    %v254 = vadd.f32 0.0, %v253
    %v255 = vpop.f32.mrb[0].mxu0
    %v256 = vadd.f32 0.0, %v255
    %257 = vmatprep.mubr.f32.mxu0 0.0
    %258 = vmatmul.mubr.f32.gmra.mrb[0].mxu0 %v131
    %v259 = vpop.f32.mrb[0].mxu0
    %v260 = vadd.f32 0.0, %v259
    %v261 = vpop.f32.mrb[0].mxu0
    %v262 = vadd.f32 0.0, %v261
    %263 = vmatprep.mubr.f32.mxu0 0.0
    %264 = vmatmul.mubr.f32.gmra.mrb[0].mxu0 %v132
    %v265 = vpop.f32.mrb[0].mxu0
    %v266 = vadd.f32 0.0, %v265
    %v267 = vpop.f32.mrb[0].mxu0
    %v268 = vadd.f32 0.0, %v267
    %269 = vmatprep.mubr.f32.mxu0 0.0
    %270 = vmatmul.mubr.f32.gmra.mrb[0].mxu0 %v133
    %v271 = vpop.f32.mrb[0].mxu0
    %v272 = vadd.f32 0.0, %v271
    %v273 = vpop.f32.mrb[0].mxu0
    %v274 = vadd.f32 0.0, %v273
    %275 = vmatprep.mubr.f32.mxu0 0.0
    %276 = vmatmul.mubr.f32.gmra.mrb[0].mxu0 %v134
    %v277 = vpop.f32.mrb[0].mxu0
    %v278 = vadd.f32 0.0, %v277
    %v279 = vpop.f32.mrb[0].mxu0
    %v280 = vadd.f32 0.0, %v279
    %281 = vmatprep.mubr.f32.mxu0 0.0
    %282 = vmatmul.mubr.f32.gmra.mrb[0].mxu0 %v135
    %v283 = vpop.f32.mrb[0].mxu0
    %v284 = vadd.f32 0.0, %v283
    %v285 = vpop.f32.mrb[0].mxu0
    %v286 = vadd.f32 0.0, %v285
    %287 = vmatprep.mubr.f32.mxu0 0.0
    %288 = vmatmul.mubr.f32.gmra.mrb[0].mxu0 %v136
    %v289 = vpop.f32.mrb[0].mxu0
    %v290 = vadd.f32 0.0, %v289
    %v291 = vpop.f32.mrb[0].mxu0
    %v292 = vadd.f32 0.0, %v291
    %293 = vmatprep.mubr.f32.mxu0 0.0
    %294 = vmatmul.mubr.f32.gmra.mrb[0].mxu0 %v137
    %v295 = vpop.f32.mrb[0].mxu0
    %v296 = vadd.f32 0.0, %v295
    %v297 = vpop.f32.mrb[0].mxu0
    %v298 = vadd.f32 0.0, %v297
    %299 = vmatprep.mubr.f32.mxu0 0.0
    %300 = vmatmul.mubr.f32.gmra.mrb[0].mxu0 %v138
    %v301 = vpop.f32.mrb[0].mxu0
    %v302 = vadd.f32 0.0, %v301
    %v303 = vpop.f32.mrb[0].mxu0
    %v304 = vadd.f32 0.0, %v303
    %305 = vmatprep.mubr.f32.mxu0 0.0
    %306 = vmatmul.mubr.f32.gmra.mrb[0].mxu0 %v139
    %v307 = vpop.f32.mrb[0].mxu0
    %v308 = vadd.f32 0.0, %v307
    %v309 = vpop.f32.mrb[0].mxu0
    %v310 = vadd.f32 0.0, %v309
    %311 = vmatprep.mubr.f32.mxu0 0.0
    %312 = vmatmul.mubr.f32.gmra.mrb[0].mxu0 %v140
    %v313 = vpop.f32.mrb[0].mxu0
    %v314 = vadd.f32 0.0, %v313
    %v315 = vpop.f32.mrb[0].mxu0
    %v316 = vadd.f32 0.0, %v315
    %317 = vmatprep.mubr.f32.mxu0 0.0
    %318 = vmatmul.mubr.f32.gmra.mrb[0].mxu0 %v141
    %v319 = vpop.f32.mrb[0].mxu0
    %v320 = vadd.f32 0.0, %v319
    %v321 = vpop.f32.mrb[0].mxu0
    %v322 = vadd.f32 0.0, %v321
    %323 = vmatprep.mubr.f32.mxu0 0.0
    %324 = vmatmul.mubr.f32.gmra.mrb[0].mxu0 %v142
    %v325 = vpop.f32.mrb[0].mxu0
    %v326 = vadd.f32 0.0, %v325
    %v327 = vpop.f32.mrb[0].mxu0
    %v328 = vadd.f32 0.0, %v327
    %329 = vmatprep.mubr.f32.mxu0 0.0
    %330 = vmatmul.mubr.f32.gmra.mrb[0].mxu0 %v143
    %v331 = vpop.f32.mrb[0].mxu0
    %v332 = vadd.f32 0.0, %v331
    %v333 = vpop.f32.mrb[0].mxu0
    %v334 = vadd.f32 0.0, %v333
    %335 = vmatprep.mubr.f32.mxu0 0.0
    %336 = vmatmul.mubr.f32.gmra.mrb[0].mxu0 %v144
    %v337 = vpop.f32.mrb[0].mxu0
    %v338 = vadd.f32 0.0, %v337
    %v339 = vpop.f32.mrb[0].mxu0
    %v340 = vadd.f32 0.0, %v339
    %341 = vmatprep.mubr.f32.mxu0 0.0
    %342 = vmatmul.mubr.f32.gmra.mrb[0].mxu0 %v145
    %v343 = vpop.f32.mrb[0].mxu0
    %v344 = vadd.f32 0.0, %v343
    %v345 = vpop.f32.mrb[0].mxu0
    %v346 = vadd.f32 0.0, %v345
    %347 = vmatprep.mubr.f32.mxu0 0.0
    %348 = vmatmul.mubr.f32.gmra.mrb[0].mxu0 %v146
    %v349 = vpop.f32.mrb[0].mxu0
    %v350 = vadd.f32 0.0, %v349
    %v351 = vpop.f32.mrb[0].mxu0
    %v352 = vadd.f32 0.0, %v351
    %353 = vmatprep.mubr.f32.mxu0 0.0
    %354 = vmatmul.mubr.f32.gmra.mrb[0].mxu0 %v147
    %v355 = vpop.f32.mrb[0].mxu0
    %v356 = vadd.f32 0.0, %v355
    %v357 = vpop.f32.mrb[0].mxu0
    %v358 = vadd.f32 0.0, %v357
    %359 = vmatprep.mubr.f32.mxu0 0.0
    %360 = vmatmul.mubr.f32.gmra.mrb[0].mxu0 %v148
    %v361 = vpop.f32.mrb[0].mxu0
    %v362 = vadd.f32 0.0, %v361
    %v363 = vpop.f32.mrb[0].mxu0
    %v364 = vadd.f32 0.0, %v363
    %365 = vmatprep.mubr.f32.mxu0 0.0
    %366 = vmatmul.mubr.f32.gmra.mrb[0].mxu0 %v149
    %v367 = vpop.f32.mrb[0].mxu0
    %v368 = vadd.f32 0.0, %v367
    %v369 = vpop.f32.mrb[0].mxu0
    %v370 = vadd.f32 0.0, %v369
    %371 = vmatprep.mubr.f32.mxu0 0.0
    %372 = vmatmul.mubr.f32.gmra.mrb[0].mxu0 %v150
    %v373 = vpop.f32.mrb[0].mxu0
    %v374 = vadd.f32 0.0, %v373
    %v375 = vpop.f32.mrb[0].mxu0
    %v376 = vadd.f32 0.0, %v375
    %377 = vmatprep.mubr.f32.mxu0 0.0
    %378 = vmatmul.mubr.f32.gmra.mrb[0].mxu0 %v151
    %v379 = vpop.f32.mrb[0].mxu0
    %v380 = vadd.f32 0.0, %v379
    %v381 = vpop.f32.mrb[0].mxu0
    %v382 = vadd.f32 0.0, %v381
    %383 = vmatprep.mubr.f32.mxu0 0.0
    %384 = vmatmul.mubr.f32.gmra.mrb[0].mxu0 %v152
    %v385 = vpop.f32.mrb[0].mxu0
    %v386 = vadd.f32 0.0, %v385
    %v387 = vpop.f32.mrb[0].mxu0
    %v388 = vadd.f32 0.0, %v387
    %389 = vmatprep.mubr.f32.mxu0 0.0
    %390 = vmatmul.mubr.f32.gmra.mrb[0].mxu0 %v153
    %v391 = vpop.f32.mrb[0].mxu0
    %v392 = vadd.f32 0.0, %v391
    %v393 = vpop.f32.mrb[0].mxu0
    %v394 = vadd.f32 0.0, %v393
    %395 = vmatprep.mubr.f32.mxu0 0.0
    %396 = vmatmul.mubr.f32.gmra.mrb[0].mxu0 %v154
    %v397 = vpop.f32.mrb[0].mxu0
    %v398 = vadd.f32 0.0, %v397
    %v399 = vpop.f32.mrb[0].mxu0
    %v400 = vadd.f32 0.0, %v399
    %401 = vmatprep.mubr.f32.mxu0 0.0
    %402 = vmatmul.mubr.f32.gmra.mrb[0].mxu0 %v155
    %v403 = vpop.f32.mrb[0].mxu0
    %v404 = vadd.f32 0.0, %v403
    %v405 = vpop.f32.mrb[0].mxu0
    %v406 = vadd.f32 0.0, %v405
    %407 = vmatprep.mubr.f32.mxu0 0.0
    %408 = vmatmul.mubr.f32.gmra.mrb[0].mxu0 %v156
    %v409 = vpop.f32.mrb[0].mxu0
    %v410 = vadd.f32 0.0, %v409
    %v411 = vpop.f32.mrb[0].mxu0
    %v412 = vadd.f32 0.0, %v411
    %413 = vdwg.mxu0
    %414 = vmatprep.subr.mxu0 %v64
    %415 = vmatpush1.msra.mxu0 %v63
    %416 = vmatprep.subr.mxu0 %v68
    %417 = vmatpush1.msra.mxu0 %v67
    %418 = vmatprep.subr.mxu0 %v72
    %419 = vmatpush1.msra.mxu0 %v71
    %420 = vmatprep.subr.mxu0 %v76
    %421 = vmatpush1.msra.mxu0 %v75
    %422 = vmatprep.subr.mxu0 %v80
    %423 = vmatpush1.msra.mxu0 %v79
    %424 = vmatprep.subr.mxu0 %v84
    %425 = vmatpush1.msra.mxu0 %v83
    %426 = vmatprep.subr.mxu0 %v88
    %427 = vmatpush1.msra.mxu0 %v87
    %428 = vmatprep.subr.mxu0 %v92
    %429 = vmatpush1.msra.mxu0 %v91
    %430 = vmatprep.subr.mxu0 %v96
    %431 = vmatpush1.msra.mxu0 %v95
    %432 = vmatprep.subr.mxu0 %v100
    %433 = vmatpush1.msra.mxu0 %v99
    %434 = vmatprep.subr.mxu0 %v104
    %435 = vmatpush1.msra.mxu0 %v103
    %436 = vmatprep.subr.mxu0 %v108
    %437 = vmatpush1.msra.mxu0 %v107
    %438 = vmatprep.subr.mxu0 %v112
    %439 = vmatpush1.msra.mxu0 %v111
    %440 = vmatprep.subr.mxu0 %v116
    %441 = vmatpush1.msra.mxu0 %v115
    %442 = vmatprep.subr.mxu0 %v120
    %443 = vmatpush1.msra.mxu0 %v119
    %444 = vmatprep.subr.mxu0 %v124
    %445 = vmatpush1.msra.mxu0 %v123
    %446 = vmatprep.subr.mxu0 0.0
    %447 = vmatpush1.msra.mxu0 0.0
    %448 = vmatprep.subr.mxu0 0.0
    %449 = vmatpush1.msra.mxu0 0.0
    %450 = vmatprep.subr.mxu0 0.0
    %451 = vmatpush1.msra.mxu0 0.0
    %452 = vmatprep.subr.mxu0 0.0
    %453 = vmatpush1.msra.mxu0 0.0
    %454 = vmatprep.subr.mxu0 0.0
    %455 = vmatpush1.msra.mxu0 0.0
    %456 = vmatprep.subr.mxu0 0.0
    %457 = vmatpush1.msra.mxu0 0.0
    %458 = vmatprep.subr.mxu0 0.0
    %459 = vmatpush1.msra.mxu0 0.0
    %460 = vmatprep.subr.mxu0 0.0
    %461 = vmatpush1.msra.mxu0 0.0
    %462 = vmatprep.subr.mxu0 0.0
    %463 = vmatpush1.msra.mxu0 0.0
    %464 = vmatprep.subr.mxu0 0.0
    %465 = vmatpush1.msra.mxu0 0.0
    %466 = vmatprep.subr.mxu0 0.0
    %467 = vmatpush1.msra.mxu0 0.0
    %468 = vmatprep.subr.mxu0 0.0
    %469 = vmatpush1.msra.mxu0 0.0
    %470 = vmatprep.subr.mxu0 0.0
    %471 = vmatpush1.msra.mxu0 0.0
    %472 = vmatprep.subr.mxu0 0.0
    %473 = vmatpush1.msra.mxu0 0.0
    %474 = vmatprep.subr.mxu0 0.0
    %475 = vmatpush1.msra.mxu0 0.0
    %476 = vmatprep.subr.mxu0 0.0
    %477 = vmatpush1.msra.mxu0 0.0
    %478 = vmatprep.mubr.f32.mxu0 0.0
    %479 = vmatmul.mubr.f32.gmra.mrb[0].mxu0 %v125
    %v480 = vpop.f32.mrb[0].mxu0
    %v481 = vadd.f32 0.0, %v480
    %v482 = vpop.f32.mrb[0].mxu0
    %v483 = vadd.f32 0.0, %v482
    %484 = vmatprep.mubr.f32.mxu0 0.0
    %485 = vmatmul.mubr.f32.gmra.mrb[0].mxu0 %v126
    %v486 = vpop.f32.mrb[0].mxu0
    %v487 = vadd.f32 0.0, %v486
    %v488 = vpop.f32.mrb[0].mxu0
    %v489 = vadd.f32 0.0, %v488
    %490 = vmatprep.mubr.f32.mxu0 0.0
    %491 = vmatmul.mubr.f32.gmra.mrb[0].mxu0 %v127
    %v492 = vpop.f32.mrb[0].mxu0
    %v493 = vadd.f32 0.0, %v492
    %v494 = vpop.f32.mrb[0].mxu0
    %v495 = vadd.f32 0.0, %v494
    %496 = vmatprep.mubr.f32.mxu0 0.0
    %497 = vmatmul.mubr.f32.gmra.mrb[0].mxu0 %v128
    %v498 = vpop.f32.mrb[0].mxu0
    %v499 = vadd.f32 0.0, %v498
    %v500 = vpop.f32.mrb[0].mxu0
    %v501 = vadd.f32 0.0, %v500
    %502 = vmatprep.mubr.f32.mxu0 0.0
    %503 = vmatmul.mubr.f32.gmra.mrb[0].mxu0 %v129
    %v504 = vpop.f32.mrb[0].mxu0
    %v505 = vadd.f32 0.0, %v504
    %v506 = vpop.f32.mrb[0].mxu0
    %v507 = vadd.f32 0.0, %v506
    %508 = vmatprep.mubr.f32.mxu0 0.0
    %509 = vmatmul.mubr.f32.gmra.mrb[0].mxu0 %v130
    %v510 = vpop.f32.mrb[0].mxu0
    %v511 = vadd.f32 0.0, %v510
    %v512 = vpop.f32.mrb[0].mxu0
    %v513 = vadd.f32 0.0, %v512
    %514 = vmatprep.mubr.f32.mxu0 0.0
    %515 = vmatmul.mubr.f32.gmra.mrb[0].mxu0 %v131
    %v516 = vpop.f32.mrb[0].mxu0
    %v517 = vadd.f32 0.0, %v516
    %v518 = vpop.f32.mrb[0].mxu0
    %v519 = vadd.f32 0.0, %v518
    %520 = vmatprep.mubr.f32.mxu0 0.0
    %521 = vmatmul.mubr.f32.gmra.mrb[0].mxu0 %v132
    %v522 = vpop.f32.mrb[0].mxu0
    %v523 = vadd.f32 0.0, %v522
    %v524 = vpop.f32.mrb[0].mxu0
    %v525 = vadd.f32 0.0, %v524
    %526 = vmatprep.mubr.f32.mxu0 0.0
    %527 = vmatmul.mubr.f32.gmra.mrb[0].mxu0 %v133
    %v528 = vpop.f32.mrb[0].mxu0
    %v529 = vadd.f32 0.0, %v528
    %v530 = vpop.f32.mrb[0].mxu0
    %v531 = vadd.f32 0.0, %v530
    %532 = vmatprep.mubr.f32.mxu0 0.0
    %533 = vmatmul.mubr.f32.gmra.mrb[0].mxu0 %v134
    %v534 = vpop.f32.mrb[0].mxu0
    %v535 = vadd.f32 0.0, %v534
    %v536 = vpop.f32.mrb[0].mxu0
    %v537 = vadd.f32 0.0, %v536
    %538 = vmatprep.mubr.f32.mxu0 0.0
    %539 = vmatmul.mubr.f32.gmra.mrb[0].mxu0 %v135
    %v540 = vpop.f32.mrb[0].mxu0
    %v541 = vadd.f32 0.0, %v540
    %v542 = vpop.f32.mrb[0].mxu0
    %v543 = vadd.f32 0.0, %v542
    %544 = vmatprep.mubr.f32.mxu0 0.0
    %545 = vmatmul.mubr.f32.gmra.mrb[0].mxu0 %v136
    %v546 = vpop.f32.mrb[0].mxu0
    %v547 = vadd.f32 0.0, %v546
    %v548 = vpop.f32.mrb[0].mxu0
    %v549 = vadd.f32 0.0, %v548
    %550 = vmatprep.mubr.f32.mxu0 0.0
    %551 = vmatmul.mubr.f32.gmra.mrb[0].mxu0 %v137
    %v552 = vpop.f32.mrb[0].mxu0
    %v553 = vadd.f32 0.0, %v552
    %v554 = vpop.f32.mrb[0].mxu0
    %v555 = vadd.f32 0.0, %v554
    %556 = vmatprep.mubr.f32.mxu0 0.0
    %557 = vmatmul.mubr.f32.gmra.mrb[0].mxu0 %v138
    %v558 = vpop.f32.mrb[0].mxu0
    %v559 = vadd.f32 0.0, %v558
    %v560 = vpop.f32.mrb[0].mxu0
    %v561 = vadd.f32 0.0, %v560
    %562 = vmatprep.mubr.f32.mxu0 0.0
    %563 = vmatmul.mubr.f32.gmra.mrb[0].mxu0 %v139
    %v564 = vpop.f32.mrb[0].mxu0
    %v565 = vadd.f32 0.0, %v564
    %v566 = vpop.f32.mrb[0].mxu0
    %v567 = vadd.f32 0.0, %v566
    %568 = vmatprep.mubr.f32.mxu0 0.0
    %569 = vmatmul.mubr.f32.gmra.mrb[0].mxu0 %v140
    %v570 = vpop.f32.mrb[0].mxu0
    %v571 = vadd.f32 0.0, %v570
    %v572 = vpop.f32.mrb[0].mxu0
    %v573 = vadd.f32 0.0, %v572
    %574 = vmatprep.mubr.f32.mxu0 0.0
    %575 = vmatmul.mubr.f32.gmra.mrb[0].mxu0 %v141
    %v576 = vpop.f32.mrb[0].mxu0
    %v577 = vadd.f32 0.0, %v576
    %v578 = vpop.f32.mrb[0].mxu0
    %v579 = vadd.f32 0.0, %v578
    %580 = vmatprep.mubr.f32.mxu0 0.0
    %581 = vmatmul.mubr.f32.gmra.mrb[0].mxu0 %v142
    %v582 = vpop.f32.mrb[0].mxu0
    %v583 = vadd.f32 0.0, %v582
    %v584 = vpop.f32.mrb[0].mxu0
    %v585 = vadd.f32 0.0, %v584
    %586 = vmatprep.mubr.f32.mxu0 0.0
    %587 = vmatmul.mubr.f32.gmra.mrb[0].mxu0 %v143
    %v588 = vpop.f32.mrb[0].mxu0
    %v589 = vadd.f32 0.0, %v588
    %v590 = vpop.f32.mrb[0].mxu0
    %v591 = vadd.f32 0.0, %v590
    %592 = vmatprep.mubr.f32.mxu0 0.0
    %593 = vmatmul.mubr.f32.gmra.mrb[0].mxu0 %v144
    %v594 = vpop.f32.mrb[0].mxu0
    %v595 = vadd.f32 0.0, %v594
    %v596 = vpop.f32.mrb[0].mxu0
    %v597 = vadd.f32 0.0, %v596
    %598 = vmatprep.mubr.f32.mxu0 0.0
    %599 = vmatmul.mubr.f32.gmra.mrb[0].mxu0 %v145
    %v600 = vpop.f32.mrb[0].mxu0
    %v601 = vadd.f32 0.0, %v600
    %v602 = vpop.f32.mrb[0].mxu0
    %v603 = vadd.f32 0.0, %v602
    %604 = vmatprep.mubr.f32.mxu0 0.0
    %605 = vmatmul.mubr.f32.gmra.mrb[0].mxu0 %v146
    %v606 = vpop.f32.mrb[0].mxu0
    %v607 = vadd.f32 0.0, %v606
    %v608 = vpop.f32.mrb[0].mxu0
    %v609 = vadd.f32 0.0, %v608
    %610 = vmatprep.mubr.f32.mxu0 0.0
    %611 = vmatmul.mubr.f32.gmra.mrb[0].mxu0 %v147
    %v612 = vpop.f32.mrb[0].mxu0
    %v613 = vadd.f32 0.0, %v612
    %v614 = vpop.f32.mrb[0].mxu0
    %v615 = vadd.f32 0.0, %v614
    %616 = vmatprep.mubr.f32.mxu0 0.0
    %617 = vmatmul.mubr.f32.gmra.mrb[0].mxu0 %v148
    %v618 = vpop.f32.mrb[0].mxu0
    %v619 = vadd.f32 0.0, %v618
    %v620 = vpop.f32.mrb[0].mxu0
    %v621 = vadd.f32 0.0, %v620
    %622 = vmatprep.mubr.f32.mxu0 0.0
    %623 = vmatmul.mubr.f32.gmra.mrb[0].mxu0 %v149
    %v624 = vpop.f32.mrb[0].mxu0
    %v625 = vadd.f32 0.0, %v624
    %v626 = vpop.f32.mrb[0].mxu0
    %v627 = vadd.f32 0.0, %v626
    %628 = vmatprep.mubr.f32.mxu0 0.0
    %629 = vmatmul.mubr.f32.gmra.mrb[0].mxu0 %v150
    %v630 = vpop.f32.mrb[0].mxu0
    %v631 = vadd.f32 0.0, %v630
    %v632 = vpop.f32.mrb[0].mxu0
    %v633 = vadd.f32 0.0, %v632
    %634 = vmatprep.mubr.f32.mxu0 0.0
    %635 = vmatmul.mubr.f32.gmra.mrb[0].mxu0 %v151
    %v636 = vpop.f32.mrb[0].mxu0
    %v637 = vadd.f32 0.0, %v636
    %v638 = vpop.f32.mrb[0].mxu0
    %v639 = vadd.f32 0.0, %v638
    %640 = vmatprep.mubr.f32.mxu0 0.0
    %641 = vmatmul.mubr.f32.gmra.mrb[0].mxu0 %v152
    %v642 = vpop.f32.mrb[0].mxu0
    %v643 = vadd.f32 0.0, %v642
    %v644 = vpop.f32.mrb[0].mxu0
    %v645 = vadd.f32 0.0, %v644
    %646 = vmatprep.mubr.f32.mxu0 0.0
    %647 = vmatmul.mubr.f32.gmra.mrb[0].mxu0 %v153
    %v648 = vpop.f32.mrb[0].mxu0
    %v649 = vadd.f32 0.0, %v648
    %v650 = vpop.f32.mrb[0].mxu0
    %v651 = vadd.f32 0.0, %v650
    %652 = vmatprep.mubr.f32.mxu0 0.0
    %653 = vmatmul.mubr.f32.gmra.mrb[0].mxu0 %v154
    %v654 = vpop.f32.mrb[0].mxu0
    %v655 = vadd.f32 0.0, %v654
    %v656 = vpop.f32.mrb[0].mxu0
    %v657 = vadd.f32 0.0, %v656
    %658 = vmatprep.mubr.f32.mxu0 0.0
    %659 = vmatmul.mubr.f32.gmra.mrb[0].mxu0 %v155
    %v660 = vpop.f32.mrb[0].mxu0
    %v661 = vadd.f32 0.0, %v660
    %v662 = vpop.f32.mrb[0].mxu0
    %v663 = vadd.f32 0.0, %v662
    %664 = vmatprep.mubr.f32.mxu0 0.0
    %665 = vmatmul.mubr.f32.gmra.mrb[0].mxu0 %v156
    %v666 = vpop.f32.mrb[0].mxu0
    %v667 = vadd.f32 0.0, %v666
    %v668 = vpop.f32.mrb[0].mxu0
    %v669 = vadd.f32 0.0, %v668
    %670 = vdwg.mxu0
    %v671 = vld [vmem:[#allocation2] sm:$0xff]
    %v672 = vld [vmem:[#allocation2 + $0x8] sm:$0xff]
    %v673 = vld [vmem:[#allocation2 + $0x10] sm:$0xff]
    %v674 = vld [vmem:[#allocation2 + $0x18] sm:$0xff]
    %v675 = vld [vmem:[#allocation2 + $0x20] sm:$0xff]
    %v676 = vld [vmem:[#allocation2 + $0x28] sm:$0xff]
    %v677 = vld [vmem:[#allocation2 + $0x30] sm:$0xff]
    %v678 = vld [vmem:[#allocation2 + $0x38] sm:$0xff]
    %v679 = vld [vmem:[#allocation2 + $0x40] sm:$0xff]
    %v680 = vld [vmem:[#allocation2 + $0x48] sm:$0xff]
    %v681 = vld [vmem:[#allocation2 + $0x50] sm:$0xff]
    %v682 = vld [vmem:[#allocation2 + $0x58] sm:$0xff]
    %v683 = vld [vmem:[#allocation2 + $0x60] sm:$0xff]
    %v684 = vld [vmem:[#allocation2 + $0x68] sm:$0xff]
    %v685 = vld [vmem:[#allocation2 + $0x70] sm:$0xff]
    %v686 = vld [vmem:[#allocation2 + $0x78] sm:$0xff]
    %v687 = vld [vmem:[#allocation2 + $0x80] sm:$0xff]
    %v688 = vld [vmem:[#allocation2 + $0x88] sm:$0xff]
    %v689 = vld [vmem:[#allocation2 + $0x90] sm:$0xff]
    %v690 = vld [vmem:[#allocation2 + $0x98] sm:$0xff]
    %v691 = vld [vmem:[#allocation2 + $0xa0] sm:$0xff]
    %v692 = vld [vmem:[#allocation2 + $0xa8] sm:$0xff]
    %v693 = vld [vmem:[#allocation2 + $0xb0] sm:$0xff]
    %v694 = vld [vmem:[#allocation2 + $0xb8] sm:$0xff]
    %v695 = vld [vmem:[#allocation2 + $0xc0] sm:$0xff]
    %v696 = vld [vmem:[#allocation2 + $0xc8] sm:$0xff]
    %v697 = vld [vmem:[#allocation2 + $0xd0] sm:$0xff]
    %v698 = vld [vmem:[#allocation2 + $0xd8] sm:$0xff]
    %v699 = vld [vmem:[#allocation2 + $0xe0] sm:$0xff]
    %v700 = vld [vmem:[#allocation2 + $0xe8] sm:$0xff]
    %v701 = vld [vmem:[#allocation2 + $0xf0] sm:$0xff]
    %v702 = vld [vmem:[#allocation2 + $0xf8] sm:$0xff]
    %v703 = vld [vmem:[#allocation2 + $0x100] sm:$0xff]
    %v704 = vld [vmem:[#allocation2 + $0x108] sm:$0xff]
    %v705 = vld [vmem:[#allocation2 + $0x110] sm:$0xff]
    %v706 = vld [vmem:[#allocation2 + $0x118] sm:$0xff]
    %v707 = vld [vmem:[#allocation2 + $0x120] sm:$0xff]
    %v708 = vld [vmem:[#allocation2 + $0x128] sm:$0xff]
    %v709 = vld [vmem:[#allocation2 + $0x130] sm:$0xff]
    %v710 = vld [vmem:[#allocation2 + $0x138] sm:$0xff]
    %v711 = vld [vmem:[#allocation2 + $0x140] sm:$0xff]
    %v712 = vld [vmem:[#allocation2 + $0x148] sm:$0xff]
    %v713 = vld [vmem:[#allocation2 + $0x150] sm:$0xff]
    %v714 = vld [vmem:[#allocation2 + $0x158] sm:$0xff]
    %v715 = vld [vmem:[#allocation2 + $0x160] sm:$0xff]
    %v716 = vld [vmem:[#allocation2 + $0x168] sm:$0xff]
    %v717 = vld [vmem:[#allocation2 + $0x170] sm:$0xff]
    %v718 = vld [vmem:[#allocation2 + $0x178] sm:$0xff]
    %v719 = vld [vmem:[#allocation2 + $0x180] sm:$0xff]
    %v720 = vld [vmem:[#allocation2 + $0x188] sm:$0xff]
    %v721 = vld [vmem:[#allocation2 + $0x190] sm:$0xff]
    %v722 = vld [vmem:[#allocation2 + $0x198] sm:$0xff]
    %v723 = vld [vmem:[#allocation2 + $0x1a0] sm:$0xff]
    %v724 = vld [vmem:[#allocation2 + $0x1a8] sm:$0xff]
    %v725 = vld [vmem:[#allocation2 + $0x1b0] sm:$0xff]
    %v726 = vld [vmem:[#allocation2 + $0x1b8] sm:$0xff]
    %v727 = vld [vmem:[#allocation2 + $0x1c0] sm:$0xff]
    %v728 = vld [vmem:[#allocation2 + $0x1c8] sm:$0xff]
    %v729 = vld [vmem:[#allocation2 + $0x1d0] sm:$0xff]
    %v730 = vld [vmem:[#allocation2 + $0x1d8] sm:$0xff]
    %v731 = vld [vmem:[#allocation2 + $0x1e0] sm:$0xff]
    %v732 = vld [vmem:[#allocation2 + $0x1e8] sm:$0xff]
    %v733 = vld [vmem:[#allocation2 + $0x1f0] sm:$0xff]
    %v734 = vld [vmem:[#allocation2 + $0x1f8] sm:$0xff]
    %v735 = vld [vmem:[#allocation2 + $0x200] sm:$0xff]
    %v736 = vld [vmem:[#allocation2 + $0x208] sm:$0xff]
    %v737 = vld [vmem:[#allocation2 + $0x210] sm:$0xff]
    %v738 = vld [vmem:[#allocation2 + $0x218] sm:$0xff]
    %v739 = vld [vmem:[#allocation2 + $0x220] sm:$0xff]
    %v740 = vld [vmem:[#allocation2 + $0x228] sm:$0xff]
    %v741 = vld [vmem:[#allocation2 + $0x230] sm:$0xff]
    %v742 = vld [vmem:[#allocation2 + $0x238] sm:$0xff]
    %v743 = vld [vmem:[#allocation2 + $0x240] sm:$0xff]
    %v744 = vld [vmem:[#allocation2 + $0x248] sm:$0xff]
    %v745 = vld [vmem:[#allocation2 + $0x250] sm:$0xff]
    %v746 = vld [vmem:[#allocation2 + $0x258] sm:$0xff]
    %v747 = vld [vmem:[#allocation2 + $0x260] sm:$0xff]
    %v748 = vld [vmem:[#allocation2 + $0x268] sm:$0xff]
    %v749 = vld [vmem:[#allocation2 + $0x270] sm:$0xff]
    %v750 = vld [vmem:[#allocation2 + $0x278] sm:$0xff]
    %v751 = vld [vmem:[#allocation2 + $0x280] sm:$0xff]
    %v752 = vld [vmem:[#allocation2 + $0x288] sm:$0xff]
    %v753 = vld [vmem:[#allocation2 + $0x290] sm:$0xff]
    %v754 = vld [vmem:[#allocation2 + $0x298] sm:$0xff]
    %v755 = vld [vmem:[#allocation2 + $0x2a0] sm:$0xff]
    %v756 = vld [vmem:[#allocation2 + $0x2a8] sm:$0xff]
    %v757 = vld [vmem:[#allocation2 + $0x2b0] sm:$0xff]
    %v758 = vld [vmem:[#allocation2 + $0x2b8] sm:$0xff]
    %v759 = vld [vmem:[#allocation2 + $0x2c0] sm:$0xff]
    %v760 = vld [vmem:[#allocation2 + $0x2c8] sm:$0xff]
    %v761 = vld [vmem:[#allocation2 + $0x2d0] sm:$0xff]
    %v762 = vld [vmem:[#allocation2 + $0x2d8] sm:$0xff]
    %v763 = vld [vmem:[#allocation2 + $0x2e0] sm:$0xff]
    %v764 = vld [vmem:[#allocation2 + $0x2e8] sm:$0xff]
    %v765 = vld [vmem:[#allocation2 + $0x2f0] sm:$0xff]
    %v766 = vld [vmem:[#allocation2 + $0x2f8] sm:$0xff]
    %v767 = vld [vmem:[#allocation2 + $0x300] sm:$0xff]
    %v768 = vld [vmem:[#allocation2 + $0x308] sm:$0xff]
    %v769 = vld [vmem:[#allocation2 + $0x310] sm:$0xff]
    %v770 = vld [vmem:[#allocation2 + $0x318] sm:$0xff]
    %v771 = vld [vmem:[#allocation2 + $0x320] sm:$0xff]
    %v772 = vld [vmem:[#allocation2 + $0x328] sm:$0xff]
    %v773 = vld [vmem:[#allocation2 + $0x330] sm:$0xff]
    %v774 = vld [vmem:[#allocation2 + $0x338] sm:$0xff]
    %v775 = vld [vmem:[#allocation2 + $0x340] sm:$0xff]
    %v776 = vld [vmem:[#allocation2 + $0x348] sm:$0xff]
    %v777 = vld [vmem:[#allocation2 + $0x350] sm:$0xff]
    %v778 = vld [vmem:[#allocation2 + $0x358] sm:$0xff]
    %v779 = vld [vmem:[#allocation2 + $0x360] sm:$0xff]
    %v780 = vld [vmem:[#allocation2 + $0x368] sm:$0xff]
    %v781 = vld [vmem:[#allocation2 + $0x370] sm:$0xff]
    %v782 = vld [vmem:[#allocation2 + $0x378] sm:$0xff]
    %v783 = vld [vmem:[#allocation2 + $0x380] sm:$0xff]
    %v784 = vld [vmem:[#allocation2 + $0x388] sm:$0xff]
    %v785 = vld [vmem:[#allocation2 + $0x390] sm:$0xff]
    %v786 = vld [vmem:[#allocation2 + $0x398] sm:$0xff]
    %v787 = vld [vmem:[#allocation2 + $0x3a0] sm:$0xff]
    %v788 = vld [vmem:[#allocation2 + $0x3a8] sm:$0xff]
    %v789 = vld [vmem:[#allocation2 + $0x3b0] sm:$0xff]
    %v790 = vld [vmem:[#allocation2 + $0x3b8] sm:$0xff]
    %v791 = vld [vmem:[#allocation2 + $0x3c0] sm:$0xff]
    %v792 = vld [vmem:[#allocation2 + $0x3c8] sm:$0xff]
    %v793 = vld [vmem:[#allocation2 + $0x3d0] sm:$0xff]
    %v794 = vld [vmem:[#allocation2 + $0x3d8] sm:$0xff]
    %v795 = vld [vmem:[#allocation2 + $0x3e0] sm:$0xff]
    %v796 = vld [vmem:[#allocation2 + $0x3e8] sm:$0xff]
    %v797 = vld [vmem:[#allocation2 + $0x3f0] sm:$0xff]
    %v798 = vld [vmem:[#allocation2 + $0x3f8] sm:$0xff]
    %v799 = vadd.f32 %v671, %v224
    %v800 = vadd.f32 %v672, %v226
    %v801 = vadd.f32 %v673, %v481
    %v802 = vadd.f32 %v674, %v483
    %v803 = vadd.f32 %v675, %v230
    %v804 = vadd.f32 %v676, %v232
    %v805 = vadd.f32 %v677, %v487
    %v806 = vadd.f32 %v678, %v489
    %v807 = vadd.f32 %v679, %v236
    %v808 = vadd.f32 %v680, %v238
    %v809 = vadd.f32 %v681, %v493
    %v810 = vadd.f32 %v682, %v495
    %v811 = vadd.f32 %v683, %v242
    %v812 = vadd.f32 %v684, %v244
    %v813 = vadd.f32 %v685, %v499
    %v814 = vadd.f32 %v686, %v501
    %v815 = vadd.f32 %v687, %v248
    %v816 = vadd.f32 %v688, %v250
    %v817 = vadd.f32 %v689, %v505
    %v818 = vadd.f32 %v690, %v507
    %v819 = vadd.f32 %v691, %v254
    %v820 = vadd.f32 %v692, %v256
    %v821 = vadd.f32 %v693, %v511
    %v822 = vadd.f32 %v694, %v513
    %v823 = vadd.f32 %v695, %v260
    %v824 = vadd.f32 %v696, %v262
    %v825 = vadd.f32 %v697, %v517
    %v826 = vadd.f32 %v698, %v519
    %v827 = vadd.f32 %v699, %v266
    %v828 = vadd.f32 %v700, %v268
    %v829 = vadd.f32 %v701, %v523
    %v830 = vadd.f32 %v702, %v525
    %v831 = vadd.f32 %v703, %v272
    %v832 = vadd.f32 %v704, %v274
    %v833 = vadd.f32 %v705, %v529
    %v834 = vadd.f32 %v706, %v531
    %v835 = vadd.f32 %v707, %v278
    %v836 = vadd.f32 %v708, %v280
    %v837 = vadd.f32 %v709, %v535
    %v838 = vadd.f32 %v710, %v537
    %v839 = vadd.f32 %v711, %v284
    %v840 = vadd.f32 %v712, %v286
    %v841 = vadd.f32 %v713, %v541
    %v842 = vadd.f32 %v714, %v543
    %v843 = vadd.f32 %v715, %v290
    %v844 = vadd.f32 %v716, %v292
    %v845 = vadd.f32 %v717, %v547
    %v846 = vadd.f32 %v718, %v549
    %v847 = vadd.f32 %v719, %v296
    %v848 = vadd.f32 %v720, %v298
    %v849 = vadd.f32 %v721, %v553
    %v850 = vadd.f32 %v722, %v555
    %v851 = vadd.f32 %v723, %v302
    %v852 = vadd.f32 %v724, %v304
    %v853 = vadd.f32 %v725, %v559
    %v854 = vadd.f32 %v726, %v561
    %v855 = vadd.f32 %v727, %v308
    %v856 = vadd.f32 %v728, %v310
    %v857 = vadd.f32 %v729, %v565
    %v858 = vadd.f32 %v730, %v567
    %v859 = vadd.f32 %v731, %v314
    %v860 = vadd.f32 %v732, %v316
    %v861 = vadd.f32 %v733, %v571
    %v862 = vadd.f32 %v734, %v573
    %v863 = vadd.f32 %v735, %v320
    %v864 = vadd.f32 %v736, %v322
    %v865 = vadd.f32 %v737, %v577
    %v866 = vadd.f32 %v738, %v579
    %v867 = vadd.f32 %v739, %v326
    %v868 = vadd.f32 %v740, %v328
    %v869 = vadd.f32 %v741, %v583
    %v870 = vadd.f32 %v742, %v585
    %v871 = vadd.f32 %v743, %v332
    %v872 = vadd.f32 %v744, %v334
    %v873 = vadd.f32 %v745, %v589
    %v874 = vadd.f32 %v746, %v591
    %v875 = vadd.f32 %v747, %v338
    %v876 = vadd.f32 %v748, %v340
    %v877 = vadd.f32 %v749, %v595
    %v878 = vadd.f32 %v750, %v597
    %v879 = vadd.f32 %v751, %v344
    %v880 = vadd.f32 %v752, %v346
    %v881 = vadd.f32 %v753, %v601
    %v882 = vadd.f32 %v754, %v603
    %v883 = vadd.f32 %v755, %v350
    %v884 = vadd.f32 %v756, %v352
    %v885 = vadd.f32 %v757, %v607
    %v886 = vadd.f32 %v758, %v609
    %v887 = vadd.f32 %v759, %v356
    %v888 = vadd.f32 %v760, %v358
    %v889 = vadd.f32 %v761, %v613
    %v890 = vadd.f32 %v762, %v615
    %v891 = vadd.f32 %v763, %v362
    %v892 = vadd.f32 %v764, %v364
    %v893 = vadd.f32 %v765, %v619
    %v894 = vadd.f32 %v766, %v621
    %v895 = vadd.f32 %v767, %v368
    %v896 = vadd.f32 %v768, %v370
    %v897 = vadd.f32 %v769, %v625
    %v898 = vadd.f32 %v770, %v627
    %v899 = vadd.f32 %v771, %v374
    %v900 = vadd.f32 %v772, %v376
    %v901 = vadd.f32 %v773, %v631
    %v902 = vadd.f32 %v774, %v633
    %v903 = vadd.f32 %v775, %v380
    %v904 = vadd.f32 %v776, %v382
    %v905 = vadd.f32 %v777, %v637
    %v906 = vadd.f32 %v778, %v639
    %v907 = vadd.f32 %v779, %v386
    %v908 = vadd.f32 %v780, %v388
    %v909 = vadd.f32 %v781, %v643
    %v910 = vadd.f32 %v782, %v645
    %v911 = vadd.f32 %v783, %v392
    %v912 = vadd.f32 %v784, %v394
    %v913 = vadd.f32 %v785, %v649
    %v914 = vadd.f32 %v786, %v651
    %v915 = vadd.f32 %v787, %v398
    %v916 = vadd.f32 %v788, %v400
    %v917 = vadd.f32 %v789, %v655
    %v918 = vadd.f32 %v790, %v657
    %v919 = vadd.f32 %v791, %v404
    %v920 = vadd.f32 %v792, %v406
    %v921 = vadd.f32 %v793, %v661
    %v922 = vadd.f32 %v794, %v663
    %v923 = vadd.f32 %v795, %v410
    %v924 = vadd.f32 %v796, %v412
    %v925 = vadd.f32 %v797, %v667
    %v926 = vadd.f32 %v798, %v669
    %927 = vst [vmem:[#allocation8] sm:$0xff] %v799
    %928 = vst [vmem:[#allocation8 + $0x8] sm:$0xff] %v800
    %929 = vst [vmem:[#allocation8 + $0x10] sm:$0xff] %v801
    %930 = vst [vmem:[#allocation8 + $0x18] sm:$0xff] %v802
    %931 = vst [vmem:[#allocation8 + $0x20] sm:$0xff] %v803
    %932 = vst [vmem:[#allocation8 + $0x28] sm:$0xff] %v804
    %933 = vst [vmem:[#allocation8 + $0x30] sm:$0xff] %v805
    %934 = vst [vmem:[#allocation8 + $0x38] sm:$0xff] %v806
    %935 = vst [vmem:[#allocation8 + $0x40] sm:$0xff] %v807
    %936 = vst [vmem:[#allocation8 + $0x48] sm:$0xff] %v808
    %937 = vst [vmem:[#allocation8 + $0x50] sm:$0xff] %v809
    %938 = vst [vmem:[#allocation8 + $0x58] sm:$0xff] %v810
    %939 = vst [vmem:[#allocation8 + $0x60] sm:$0xff] %v811
    %940 = vst [vmem:[#allocation8 + $0x68] sm:$0xff] %v812
    %941 = vst [vmem:[#allocation8 + $0x70] sm:$0xff] %v813
    %942 = vst [vmem:[#allocation8 + $0x78] sm:$0xff] %v814
    %943 = vst [vmem:[#allocation8 + $0x80] sm:$0xff] %v815
    %944 = vst [vmem:[#allocation8 + $0x88] sm:$0xff] %v816
    %945 = vst [vmem:[#allocation8 + $0x90] sm:$0xff] %v817
    %946 = vst [vmem:[#allocation8 + $0x98] sm:$0xff] %v818
    %947 = vst [vmem:[#allocation8 + $0xa0] sm:$0xff] %v819
    %948 = vst [vmem:[#allocation8 + $0xa8] sm:$0xff] %v820
    %949 = vst [vmem:[#allocation8 + $0xb0] sm:$0xff] %v821
    %950 = vst [vmem:[#allocation8 + $0xb8] sm:$0xff] %v822
    %951 = vst [vmem:[#allocation8 + $0xc0] sm:$0xff] %v823
    %952 = vst [vmem:[#allocation8 + $0xc8] sm:$0xff] %v824
    %953 = vst [vmem:[#allocation8 + $0xd0] sm:$0xff] %v825
    %954 = vst [vmem:[#allocation8 + $0xd8] sm:$0xff] %v826
    %955 = vst [vmem:[#allocation8 + $0xe0] sm:$0xff] %v827
    %956 = vst [vmem:[#allocation8 + $0xe8] sm:$0xff] %v828
    %957 = vst [vmem:[#allocation8 + $0xf0] sm:$0xff] %v829
    %958 = vst [vmem:[#allocation8 + $0xf8] sm:$0xff] %v830
    %959 = vst [vmem:[#allocation8 + $0x100] sm:$0xff] %v831
    %960 = vst [vmem:[#allocation8 + $0x108] sm:$0xff] %v832
    %961 = vst [vmem:[#allocation8 + $0x110] sm:$0xff] %v833
    %962 = vst [vmem:[#allocation8 + $0x118] sm:$0xff] %v834
    %963 = vst [vmem:[#allocation8 + $0x120] sm:$0xff] %v835
    %964 = vst [vmem:[#allocation8 + $0x128] sm:$0xff] %v836
    %965 = vst [vmem:[#allocation8 + $0x130] sm:$0xff] %v837
    %966 = vst [vmem:[#allocation8 + $0x138] sm:$0xff] %v838
    %967 = vst [vmem:[#allocation8 + $0x140] sm:$0xff] %v839
    %968 = vst [vmem:[#allocation8 + $0x148] sm:$0xff] %v840
    %969 = vst [vmem:[#allocation8 + $0x150] sm:$0xff] %v841
    %970 = vst [vmem:[#allocation8 + $0x158] sm:$0xff] %v842
    %971 = vst [vmem:[#allocation8 + $0x160] sm:$0xff] %v843
    %972 = vst [vmem:[#allocation8 + $0x168] sm:$0xff] %v844
    %973 = vst [vmem:[#allocation8 + $0x170] sm:$0xff] %v845
    %974 = vst [vmem:[#allocation8 + $0x178] sm:$0xff] %v846
    %975 = vst [vmem:[#allocation8 + $0x180] sm:$0xff] %v847
    %976 = vst [vmem:[#allocation8 + $0x188] sm:$0xff] %v848
    %977 = vst [vmem:[#allocation8 + $0x190] sm:$0xff] %v849
    %978 = vst [vmem:[#allocation8 + $0x198] sm:$0xff] %v850
    %979 = vst [vmem:[#allocation8 + $0x1a0] sm:$0xff] %v851
    %980 = vst [vmem:[#allocation8 + $0x1a8] sm:$0xff] %v852
    %981 = vst [vmem:[#allocation8 + $0x1b0] sm:$0xff] %v853
    %982 = vst [vmem:[#allocation8 + $0x1b8] sm:$0xff] %v854
    %983 = vst [vmem:[#allocation8 + $0x1c0] sm:$0xff] %v855
    %984 = vst [vmem:[#allocation8 + $0x1c8] sm:$0xff] %v856
    %985 = vst [vmem:[#allocation8 + $0x1d0] sm:$0xff] %v857
    %986 = vst [vmem:[#allocation8 + $0x1d8] sm:$0xff] %v858
    %987 = vst [vmem:[#allocation8 + $0x1e0] sm:$0xff] %v859
    %988 = vst [vmem:[#allocation8 + $0x1e8] sm:$0xff] %v860
    %989 = vst [vmem:[#allocation8 + $0x1f0] sm:$0xff] %v861
    %990 = vst [vmem:[#allocation8 + $0x1f8] sm:$0xff] %v862
    %991 = vst [vmem:[#allocation8 + $0x200] sm:$0xff] %v863
    %992 = vst [vmem:[#allocation8 + $0x208] sm:$0xff] %v864
    %993 = vst [vmem:[#allocation8 + $0x210] sm:$0xff] %v865
    %994 = vst [vmem:[#allocation8 + $0x218] sm:$0xff] %v866
    %995 = vst [vmem:[#allocation8 + $0x220] sm:$0xff] %v867
    %996 = vst [vmem:[#allocation8 + $0x228] sm:$0xff] %v868
    %997 = vst [vmem:[#allocation8 + $0x230] sm:$0xff] %v869
    %998 = vst [vmem:[#allocation8 + $0x238] sm:$0xff] %v870
    %999 = vst [vmem:[#allocation8 + $0x240] sm:$0xff] %v871
    %1000 = vst [vmem:[#allocation8 + $0x248] sm:$0xff] %v872
    %1001 = vst [vmem:[#allocation8 + $0x250] sm:$0xff] %v873
    %1002 = vst [vmem:[#allocation8 + $0x258] sm:$0xff] %v874
    %1003 = vst [vmem:[#allocation8 + $0x260] sm:$0xff] %v875
    %1004 = vst [vmem:[#allocation8 + $0x268] sm:$0xff] %v876
    %1005 = vst [vmem:[#allocation8 + $0x270] sm:$0xff] %v877
    %1006 = vst [vmem:[#allocation8 + $0x278] sm:$0xff] %v878
    %1007 = vst [vmem:[#allocation8 + $0x280] sm:$0xff] %v879
    %1008 = vst [vmem:[#allocation8 + $0x288] sm:$0xff] %v880
    %1009 = vst [vmem:[#allocation8 + $0x290] sm:$0xff] %v881
    %1010 = vst [vmem:[#allocation8 + $0x298] sm:$0xff] %v882
    %1011 = vst [vmem:[#allocation8 + $0x2a0] sm:$0xff] %v883
    %1012 = vst [vmem:[#allocation8 + $0x2a8] sm:$0xff] %v884
    %1013 = vst [vmem:[#allocation8 + $0x2b0] sm:$0xff] %v885
    %1014 = vst [vmem:[#allocation8 + $0x2b8] sm:$0xff] %v886
    %1015 = vst [vmem:[#allocation8 + $0x2c0] sm:$0xff] %v887
    %1016 = vst [vmem:[#allocation8 + $0x2c8] sm:$0xff] %v888
    %1017 = vst [vmem:[#allocation8 + $0x2d0] sm:$0xff] %v889
    %1018 = vst [vmem:[#allocation8 + $0x2d8] sm:$0xff] %v890
    %1019 = vst [vmem:[#allocation8 + $0x2e0] sm:$0xff] %v891
    %1020 = vst [vmem:[#allocation8 + $0x2e8] sm:$0xff] %v892
    %1021 = vst [vmem:[#allocation8 + $0x2f0] sm:$0xff] %v893
    %1022 = vst [vmem:[#allocation8 + $0x2f8] sm:$0xff] %v894
    %1023 = vst [vmem:[#allocation8 + $0x300] sm:$0xff] %v895
    %1024 = vst [vmem:[#allocation8 + $0x308] sm:$0xff] %v896
    %1025 = vst [vmem:[#allocation8 + $0x310] sm:$0xff] %v897
    %1026 = vst [vmem:[#allocation8 + $0x318] sm:$0xff] %v898
    %1027 = vst [vmem:[#allocation8 + $0x320] sm:$0xff] %v899
    %1028 = vst [vmem:[#allocation8 + $0x328] sm:$0xff] %v900
    %1029 = vst [vmem:[#allocation8 + $0x330] sm:$0xff] %v901
    %1030 = vst [vmem:[#allocation8 + $0x338] sm:$0xff] %v902
    %1031 = vst [vmem:[#allocation8 + $0x340] sm:$0xff] %v903
    %1032 = vst [vmem:[#allocation8 + $0x348] sm:$0xff] %v904
    %1033 = vst [vmem:[#allocation8 + $0x350] sm:$0xff] %v905
    %1034 = vst [vmem:[#allocation8 + $0x358] sm:$0xff] %v906
    %1035 = vst [vmem:[#allocation8 + $0x360] sm:$0xff] %v907
    %1036 = vst [vmem:[#allocation8 + $0x368] sm:$0xff] %v908
    %1037 = vst [vmem:[#allocation8 + $0x370] sm:$0xff] %v909
    %1038 = vst [vmem:[#allocation8 + $0x378] sm:$0xff] %v910
    %1039 = vst [vmem:[#allocation8 + $0x380] sm:$0xff] %v911
    %1040 = vst [vmem:[#allocation8 + $0x388] sm:$0xff] %v912
    %1041 = vst [vmem:[#allocation8 + $0x390] sm:$0xff] %v913
    %1042 = vst [vmem:[#allocation8 + $0x398] sm:$0xff] %v914
    %1043 = vst [vmem:[#allocation8 + $0x3a0] sm:$0xff] %v915
    %1044 = vst [vmem:[#allocation8 + $0x3a8] sm:$0xff] %v916
    %1045 = vst [vmem:[#allocation8 + $0x3b0] sm:$0xff] %v917
    %1046 = vst [vmem:[#allocation8 + $0x3b8] sm:$0xff] %v918
    %1047 = vst [vmem:[#allocation8 + $0x3c0] sm:$0xff] %v919
    %1048 = vst [vmem:[#allocation8 + $0x3c8] sm:$0xff] %v920
    %1049 = vst [vmem:[#allocation8 + $0x3d0] sm:$0xff] %v921
    %1050 = vst [vmem:[#allocation8 + $0x3d8] sm:$0xff] %v922
    %1051 = vst [vmem:[#allocation8 + $0x3e0] sm:$0xff] %v923
    %1052 = vst [vmem:[#allocation8 + $0x3e8] sm:$0xff] %v924
    %1053 = vst [vmem:[#allocation8 + $0x3f0] sm:$0xff] %v925
    %1054 = vst [vmem:[#allocation8 + $0x3f8] sm:$0xff] %v926
    // Predicated region
    $region26: #{tpu_custom_call.1} parent=1 // pred_check
      _
    $region27: #{tpu_custom_call.1} parent=1 // pred_check_branch
      %1056 = sbr.rel (0) target = $region29
    $region28: #{tpu_custom_call.1} parent=1 // pred_region
      %s1058 = ssub.s32 16384, 16384
      %1059 = vsyncadd [#allocation4], %s1058
      %s1060 = sshll.u32 [#allocation8], 4
      %s1061 = int_to_ptr.vmem [resolvable:$true] %s1060
      %1066 = dma.vmem_to_hbm [thread:$0]  %s1061, 16384, %s3, [#allocation4], 512, 512, 32
    $region29: #{tpu_custom_call.1} parent=1 // pred_fallthru
      _
    // Predicated region
    $region30: #{tpu_custom_call.1} parent=1 // pred_check
      _
    $region31: #{tpu_custom_call.1} parent=1 // pred_check_branch
      %1068 = sbr.rel (0) target = $region33
    $region32: #{tpu_custom_call.1} parent=1 // pred_region
      %1069 = dma.done [#allocation4], 16384
    $region33: #{tpu_custom_call.1} parent=1 // pred_fallthru
      _
    %1070 = vsyncpa [#allocation3], 1
    %1071 = vsyncpa [#allocation6], 1
    %1072 = vsyncpa [#allocation4], 1

</llo_original>
